<compile_context>
chip_gen: v5e
topology: v5e:2x2
jax: 0.10.0
libtpu: 0.0.40
codegen_flags: <defaults>
</compile_context>

<pallas_src>
import functools

import jax
import jax.numpy as jnp
from jax.experimental import pallas as pl
from jax.experimental.pallas import tpu as pltpu


def _contrastive_kernel(x1_ref, x2_ref, tgt_ref, loss_ref, *, margin, eps):
    # (TB, D) embedding tiles; f32 math regardless of input dtype.
    x1 = x1_ref[...].astype(jnp.float32)
    x2 = x2_ref[...].astype(jnp.float32)
    t = tgt_ref[...].astype(jnp.float32)                      # (TB, 1) label column

    # F.pairwise_distance: ||x1 - x2 + eps||_2 along the feature axis.
    diff = x1 - x2 + eps                                      # VPU, hidden under DMA stream
    sq_dist = jnp.sum(diff * diff, axis=-1, keepdims=True)    # one XLU lane-reduce per tile
    dist = jnp.sqrt(sq_dist)                                  # (TB, 1)

    hinge = jnp.maximum(margin - dist, 0.0)
    # Per-row loss; everything below stays on the reduced (TB, 1) column.
    loss_ref[...] = 0.5 * (1.0 - t) * sq_dist + 0.5 * t * (hinge * hinge)


def _pick_tile_rows(batch, feat, itemsize):
    """Rows per grid step: ~2 MiB per input tile, >=512 rows for small D, <=4 MiB cap."""
    bytes_per_row = max(1, feat * itemsize)
    tb = (2 * 1024 * 1024) // bytes_per_row
    tb = max(tb, 512)                                         # amortize per-step overhead
    tb = min(tb, max(1, (4 * 1024 * 1024) // bytes_per_row))  # VMEM cap for large D
    tb = max(8, (tb // 8) * 8)                                # sublane multiple of 8
    b_pad8 = ((batch + 7) // 8) * 8
    return min(tb, b_pad8)


def contrastive_loss(output0, output1, target, margin, eps=1e-6, tile_rows=None):
    """Pallas TPU contrastive loss. output0/output1: (B, D); target: (B,). Returns scalar f32."""
    B, D = output0.shape
    itemsize = jnp.dtype(output0.dtype).itemsize

    tb = tile_rows if tile_rows is not None else _pick_tile_rows(B, D, itemsize)
    tb = max(8, (int(tb) // 8) * 8)
    tb = min(tb, ((B + 7) // 8) * 8)

    num_tiles = (B + tb - 1) // tb
    b_pad = num_tiles * tb
    pad = b_pad - B
    if pad:
        output0 = jnp.pad(output0, ((0, pad), (0, 0)))
        output1 = jnp.pad(output1, ((0, pad), (0, 0)))
        target = jnp.pad(target, ((0, pad),))
    tgt2d = target.reshape(b_pad, 1).astype(jnp.float32)

    kernel = functools.partial(_contrastive_kernel, margin=float(margin), eps=float(eps))

    per_row = pl.pallas_call(
        kernel,
        out_shape=jax.ShapeDtypeStruct((b_pad, 1), jnp.float32),
        grid=(num_tiles,),
        in_specs=[
            pl.BlockSpec((tb, D), lambda i: (i, 0)),
            pl.BlockSpec((tb, D), lambda i: (i, 0)),
            pl.BlockSpec((tb, 1), lambda i: (i, 0)),
        ],
        out_specs=pl.BlockSpec((tb, 1), lambda i: (i, 0)),
        compiler_params=pltpu.CompilerParams(
            # independent batch tiles -> v7x megacore shards grid steps across both TCs
            dimension_semantics=("parallel",),
            # headroom for 2 inputs x 2 pipeline buffers x <=4 MiB tiles on every gen
            vmem_limit_bytes=32 * 1024 * 1024,
        ),
        cost_estimate=pl.CostEstimate(
            flops=4 * b_pad * D,
            transcendentals=b_pad,
            bytes_accessed=2 * b_pad * D * itemsize + 8 * b_pad,
        ),
    )(output0, output1, tgt2d)

    # Mean over the TRUE batch: padded rows are sliced away, divisor is the real B.
    return jnp.sum(per_row[:B, 0]) / B


def _reference_loss(output0, output1, target, margin, eps=1e-6):
    # Pure-JAX replica of the PyTorch forward, for a correctness check.
    diff = output0.astype(jnp.float32) - output1.astype(jnp.float32) + eps
    dist = jnp.sqrt(jnp.sum(diff * diff, axis=-1))
    t = target.astype(jnp.float32)
    loss = 0.5 * (1.0 - t) * dist**2 + 0.5 * t * jnp.maximum(margin - dist, 0.0) ** 2
    return jnp.mean(loss)


if __name__ == "__main__":
    key = jax.random.PRNGKey(0)
    k0, k1, k2, k3 = jax.random.split(key, 4)

    margin = 1.0  # deterministic constructor argument (no learned params in this module)

    # Small case matching the module's forward: output is a (2, B, D) pair of embeddings.
    B, D = 8, 32
    output = jax.random.normal(k0, (2, B, D), dtype=jnp.float32)
    target = jax.random.bernoulli(k1, 0.5, (B,)).astype(jnp.float32)

    loss = jax.block_until_ready(contrastive_loss(output[0], output[1], target, margin))
    ref = jax.block_until_ready(_reference_loss(output[0], output[1], target, margin))
    assert jnp.allclose(loss, ref, rtol=1e-5, atol=1e-6), (loss, ref)

    # Multi-tile + ragged-batch path (forced small tile): grid of 3, padded last tile.
    B2, D2 = 300, 64
    output2 = jax.random.normal(k2, (2, B2, D2), dtype=jnp.float32)
    target2 = jax.random.bernoulli(k3, 0.5, (B2,)).astype(jnp.float32)
    loss2 = jax.block_until_ready(
        contrastive_loss(output2[0], output2[1], target2, margin, tile_rows=128)
    )
    ref2 = jax.block_until_ready(_reference_loss(output2[0], output2[1], target2, margin))
    assert jnp.allclose(loss2, ref2, rtol=1e-5, atol=1e-5), (loss2, ref2)

    print("KERNEL_OK")
</pallas_src>

<mosaic_0001>
module attributes {stable_mosaic.version = 11 : i64} {
  func.func @_contrastive_kernel(%arg0: i32, %arg1: memref<8x32xf32, #tpu.memory_space<vmem>>, %arg2: memref<8x32xf32, #tpu.memory_space<vmem>>, %arg3: memref<8x1xf32, #tpu.memory_space<vmem>>, %arg4: memref<8x1xf32, #tpu.memory_space<vmem>>) attributes {dimension_semantics = [#tpu.dimension_semantics<parallel>], iteration_bounds = array<i64: 1>, scalar_prefetch = 0 : i64, scratch_operands = 0 : i64, tpu.core_type = #tpu.core_type<tc>, window_params = [{transform_indices = @transform_0, window_bounds = array<i64: 8, 32>}, {transform_indices = @transform_1, window_bounds = array<i64: 8, 32>}, {transform_indices = @transform_2, window_bounds = array<i64: 8, 1>}, {transform_indices = @transform_3, window_bounds = array<i64: 8, 1>}]} {
    %c0 = arith.constant 0 : index
    %c0_0 = arith.constant 0 : index
    %0 = vector.load %arg1[%c0, %c0_0] : memref<8x32xf32, #tpu.memory_space<vmem>>, vector<8x32xf32>
    %c0_1 = arith.constant 0 : index
    %c0_2 = arith.constant 0 : index
    %1 = vector.load %arg2[%c0_1, %c0_2] : memref<8x32xf32, #tpu.memory_space<vmem>>, vector<8x32xf32>
    %c0_3 = arith.constant 0 : index
    %c0_4 = arith.constant 0 : index
    %2 = vector.load %arg3[%c0_3, %c0_4] : memref<8x1xf32, #tpu.memory_space<vmem>>, vector<8x1xf32>
    %3 = arith.subf %0, %1 : vector<8x32xf32>
    %cst = arith.constant 9.99999997E-7 : f32
    %4 = vector.broadcast %cst : f32 to vector<8x32xf32>
    %5 = arith.addf %3, %4 : vector<8x32xf32>
    %6 = arith.mulf %5, %5 : vector<8x32xf32>
    %cst_5 = arith.constant dense<0.000000e+00> : vector<8xf32>
    %7 = vector.multi_reduction <add>, %6, %cst_5 [1] : vector<8x32xf32> to vector<8xf32>
    %8 = vector.shape_cast %7 : vector<8xf32> to vector<8x1xf32>
    %9 = math.sqrt %8 : vector<8x1xf32>
    %cst_6 = arith.constant 1.000000e+00 : f32
    %10 = vector.broadcast %cst_6 : f32 to vector<8x1xf32>
    %11 = arith.subf %10, %9 : vector<8x1xf32>
    %cst_7 = arith.constant 0.000000e+00 : f32
    %12 = vector.broadcast %cst_7 : f32 to vector<8x1xf32>
    %13 = arith.maximumf %11, %12 : vector<8x1xf32>
    %cst_8 = arith.constant 1.000000e+00 : f32
    %14 = vector.broadcast %cst_8 : f32 to vector<8x1xf32>
    %15 = arith.subf %14, %2 : vector<8x1xf32>
    %cst_9 = arith.constant 5.000000e-01 : f32
    %16 = vector.broadcast %cst_9 : f32 to vector<8x1xf32>
    %17 = arith.mulf %16, %15 : vector<8x1xf32>
    %18 = arith.mulf %17, %8 : vector<8x1xf32>
    %cst_10 = arith.constant 5.000000e-01 : f32
    %19 = vector.broadcast %cst_10 : f32 to vector<8x1xf32>
    %20 = arith.mulf %19, %2 : vector<8x1xf32>
    %21 = arith.mulf %13, %13 : vector<8x1xf32>
    %22 = arith.mulf %20, %21 : vector<8x1xf32>
    %23 = arith.addf %18, %22 : vector<8x1xf32>
    %c0_11 = arith.constant 0 : index
    %c0_12 = arith.constant 0 : index
    %24 = vector.load %arg4[%c0_11, %c0_12] : memref<8x1xf32, #tpu.memory_space<vmem>>, vector<8x1xf32>
    tpu.vector_store %arg4[%c0_11, %c0_12], %23 {strides = array<i32>} : memref<8x1xf32, #tpu.memory_space<vmem>>, vector<8x1xf32>,
    return
  }
  func.func @transform_0(%arg0: i32) -> (i32, i32) {
    %c0_i32 = arith.constant 0 : i32
    %c0_i32_0 = arith.constant 0 : i32
    return %arg0, %c0_i32 : i32, i32
  }
  func.func @transform_1(%arg0: i32) -> (i32, i32) {
    %c0_i32 = arith.constant 0 : i32
    %c0_i32_0 = arith.constant 0 : i32
    return %arg0, %c0_i32 : i32, i32
  }
  func.func @transform_2(%arg0: i32) -> (i32, i32) {
    %c0_i32 = arith.constant 0 : i32
    %c0_i32_0 = arith.constant 0 : i32
    return %arg0, %c0_i32 : i32, i32
  }
  func.func @transform_3(%arg0: i32) -> (i32, i32) {
    %c0_i32 = arith.constant 0 : i32
    %c0_i32_0 = arith.constant 0 : i32
    return %arg0, %c0_i32 : i32, i32
  }
}

</mosaic_0001>

<llo_original>
// kernel: tpu_custom_call.1
$region0: #{tpu_custom_call.1}
  #allocation0 [shape = 'u32[]', space=smem, size = 0x4, offset = 0x4, fixed_abs, tag = 'smem constant byte address 0x4 - core index']
  #allocation1 [shape = 'u32[72,128]{1,0:T(1,128)}', space=vmem, size = 0x9000, scoped, tag = 'internal scratch']
  %s0 = inlined_call_operand.vmem [shape: f32[8,32], index: 0, kind: input, shape index: {}]
  %s1 = inlined_call_operand.hbm [shape: f32[8,32], index: 1, kind: input, shape index: {}]
  %s2 = inlined_call_operand.vmem [shape: f32[8,1], index: 2, kind: input, shape index: {}]
  %s3 = inlined_call_operand.vmem [shape: f32[8,1], index: 3, kind: output, shape index: {}]
  %s4 = sld [smem:[#allocation0]]
  $region26: #{tpu_custom_call.1} parent=0
    _
  %s6 = ssub.s32 1, %s4
  %s7 = scalar_select 0, %s6, %s4
  $region1: #{tpu_custom_call.1} parent=0
    #allocation2 [shape = 'u8[4096]{0}', space=vmem, size = 0x1000, scoped, tag = 'input window, operand 1, single buffered']
    #allocation3 [shape = 's32[1]{0}', space=sflag, size = 0x4, scoped, tag = 'scoped memory for tpu_custom_call.1']
    %8 = vsyncpa [#allocation3], 0
    // Predicated region
    $region2: #{tpu_custom_call.1} parent=1 // pred_check
      _
    $region3: #{tpu_custom_call.1} parent=1 // pred_check_branch
      %10 = sbr.rel (0) target = $region5
    $region4: #{tpu_custom_call.1} parent=1 // pred_region
      _
    $region5: #{tpu_custom_call.1} parent=1 // pred_fallthru
      _
    // Predicated region
    $region6: #{tpu_custom_call.1} parent=1 // pred_check
      _
    $region7: #{tpu_custom_call.1} parent=1 // pred_check_branch
      %12 = sbr.rel (0) target = $region9
    $region8: #{tpu_custom_call.1} parent=1 // pred_region
      %14 = vsyncadd [#allocation3], 0
      %s16 = sshll.u32 %s1, 4
      %s17 = int_to_ptr.hbm [resolvable:$true] %s16
      %s18 = sshll.u32 [#allocation2], 4
      %s19 = int_to_ptr.vmem [resolvable:$true] %s18
      %21 = dma.hbm_to_vmem [thread:$0]  %s17, 128, %s19, [#allocation3]
    $region9: #{tpu_custom_call.1} parent=1 // pred_fallthru
      _
    // Predicated region
    $region10: #{tpu_custom_call.1} parent=1 // pred_check
      _
    $region11: #{tpu_custom_call.1} parent=1 // pred_check_branch
      %23 = sbr.rel (0) target = $region13
    $region12: #{tpu_custom_call.1} parent=1 // pred_region
      _
    $region13: #{tpu_custom_call.1} parent=1 // pred_fallthru
      _
    // Predicated region
    $region14: #{tpu_custom_call.1} parent=1 // pred_check
      _
    $region15: #{tpu_custom_call.1} parent=1 // pred_check_branch
      %25 = sbr.rel (0) target = $region17
    $region16: #{tpu_custom_call.1} parent=1 // pred_region
      %27 = dma.done [#allocation3], 128
    $region17: #{tpu_custom_call.1} parent=1 // pred_fallthru
      _
    %v28 = vld [vmem:[%s0] sm:$0xff]
    %v29 = vld [vmem:[#allocation2] sm:$0xff]
    %v30 = vld [vmem:[%s2] sm:$0xff]
    %v31 = vsub.f32 %v28, %v29
    %v32 = vadd.f32 %v31, 1e-06
    %v33 = vmul.f32 %v32, %v32
    %vm34 = vcmask 261120
    %v35 = vsel %vm34, %v33, 0.0
    %36 = vadd.xlane.f32.xlu0 %v35
    %v37 = vpop.xlane.xlu0 %36
    %v38 = vrsqrt.pop %v37
    %v39 = vmul.f32 %v38, %v37
    %v40 = vmul.f32 %v39, %v38
    %v41 = vmul.f32 0.5, %v40
    %v42 = vsub.f32 1.5, %v41
    %v43 = vmul.f32 %v38, %v42
    %v44 = vmul.f32 %v37, %v43
    %vm45 = vcmp.eq.f32.partialorder %v37, inf
    %v46 = vsel %vm45, %v37, %v44
    %vm47 = vcmp.eq.f32.partialorder %v37, 0.0
    %v48 = vand.u32 %v37, 2147483648
    %v49 = vsel %vm47, %v48, %v46
    %v50 = vsub.f32 1.0, %v49
    %v51 = vmax.f32 %v50, 0.0
    %v52 = vsub.f32 1.0, %v30
    %v53 = vmul.f32 %v52, 0.5
    %v54 = vmul.f32 %v53, %v37
    %v55 = vmul.f32 %v30, 0.5
    %v56 = vmul.f32 %v51, %v51
    %v57 = vmul.f32 %v55, %v56
    %v58 = vadd.f32 %v54, %v57
    %vm59 = vcmask 7168
    %60 = vst.msk [vmem:[%s3] sm:$0xff] %vm59, %v58
    // Predicated region
    $region18: #{tpu_custom_call.1} parent=1 // pred_check
      _
    $region19: #{tpu_custom_call.1} parent=1 // pred_check_branch
      %62 = sbr.rel (0) target = $region21
    $region20: #{tpu_custom_call.1} parent=1 // pred_region
      _
    $region21: #{tpu_custom_call.1} parent=1 // pred_fallthru
      _
    // Predicated region
    $region22: #{tpu_custom_call.1} parent=1 // pred_check
      _
    $region23: #{tpu_custom_call.1} parent=1 // pred_check_branch
      %64 = sbr.rel (0) target = $region25
    $region24: #{tpu_custom_call.1} parent=1 // pred_region
      _
    $region25: #{tpu_custom_call.1} parent=1 // pred_fallthru
      _
    %65 = vsyncpa [#allocation3], 1

</llo_original>
